<compile_context>
chip_gen: v7x
topology: tpu7x:2x2x1
jax: 0.10.0
libtpu: 0.0.40
codegen_flags: <defaults>
</compile_context>

<pallas_src>
import jax
import jax.numpy as jnp
from jax.experimental import pallas as pl
from jax.experimental.pallas import tpu as pltpu

_LANES = 128
_SUBLANES = 8
_MAX_TILE_ROWS = 512  # 512*128*4B = 256 KiB per buffer -> safe on v5e/v6e/v7x


def _ceil_to(a, m):
    return ((a + m - 1) // m) * m


def _prelu_scale_kernel(x_ref, w_ref, o_ref):
    # fused: v = x*2 - 1 ; out = prelu(v, w)   (w is pre-broadcast per element)
    v = x_ref[...] * 2.0 - 1.0
    o_ref[...] = jnp.where(v >= 0.0, v, w_ref[...] * v)


def _run_fused_slab(x_slab, w_slab, tile_rows):
    rows, lanes = x_slab.shape
    grid = (rows // tile_rows,)
    return pl.pallas_call(
        _prelu_scale_kernel,
        out_shape=jax.ShapeDtypeStruct(x_slab.shape, x_slab.dtype),
        grid=grid,
        in_specs=[
            pl.BlockSpec((tile_rows, lanes), lambda i: (i, 0)),
            pl.BlockSpec((tile_rows, lanes), lambda i: (i, 0)),
        ],
        out_specs=pl.BlockSpec((tile_rows, lanes), lambda i: (i, 0)),
        compiler_params=pltpu.CompilerParams(
            dimension_semantics=("parallel",)),
    )(x_slab, w_slab)


def model_forward(x, y, z, w4, w5, w6):
    """Computes (F.prelu(x*2-1, w4), F.prelu(y*2-1, w5), F.prelu(z*2-1, w6))
    with PyTorch channel-dim-1 semantics, using a single fused Pallas call."""
    pairs = ((x, w4), (y, w5), (z, w6))

    flats, wflats, shapes, sizes = [], [], [], []
    for t, w in pairs:
        assert t.shape[1] == w.shape[0], "PReLU weight must match channel dim 1"
        bshape = [1] * t.ndim
        bshape[1] = w.shape[0]
        wb = jnp.broadcast_to(w.reshape(bshape).astype(t.dtype), t.shape)
        flats.append(t.reshape(-1))
        wflats.append(wb.reshape(-1))
        shapes.append(t.shape)
        sizes.append(t.size)

    total = sum(sizes)

    # Pad the packed slab so the last dim is exactly 128 lanes and rows are a
    # multiple of 8 sublanes (and of the row tile, if tiling kicks in).
    rows = _ceil_to(pl.cdiv(total, _LANES), _SUBLANES)
    if rows > _MAX_TILE_ROWS:
        rows = _ceil_to(rows, _MAX_TILE_ROWS)
        tile_rows = _MAX_TILE_ROWS
    else:
        tile_rows = rows
    padded = rows * _LANES
    pad = padded - total

    x_flat = jnp.concatenate(flats)
    w_flat = jnp.concatenate(wflats)
    if pad:
        x_flat = jnp.pad(x_flat, (0, pad))
        w_flat = jnp.pad(w_flat, (0, pad))

    out_slab = _run_fused_slab(
        x_flat.reshape(rows, _LANES),
        w_flat.reshape(rows, _LANES),
        tile_rows,
    )
    out_flat = out_slab.reshape(-1)

    outs = []
    off = 0
    for shape, n in zip(shapes, sizes):
        outs.append(out_flat[off:off + n].reshape(shape))
        off += n
    return tuple(outs)


def _ref_prelu(v, w):
    # pure-JAX reference of F.prelu with channel dim 1
    shape = [1] * v.ndim
    shape[1] = w.shape[0]
    return jnp.where(v >= 0.0, v, w.reshape(shape) * v)


if __name__ == "__main__":
    key = jax.random.PRNGKey(0)
    kx, ky, kz, k4, k5, k6, k7 = jax.random.split(key, 7)

    # shapes consistent with the pnnx test: channel dim (dim 1) matches each weight
    x = jax.random.uniform(kx, (1, 16), dtype=jnp.float32)
    y = jax.random.uniform(ky, (1, 2, 16), dtype=jnp.float32)
    z = jax.random.uniform(kz, (1, 3, 12, 16), dtype=jnp.float32)

    # deterministic parameter init (torch.rand -> uniform [0, 1))
    w4 = jax.random.uniform(k4, (16,), dtype=jnp.float32)
    w5 = jax.random.uniform(k5, (2,), dtype=jnp.float32)
    w6 = jax.random.uniform(k6, (3,), dtype=jnp.float32)
    w7 = jax.random.uniform(k7, (12,), dtype=jnp.float32)  # present in module, unused in forward

    xo, yo, zo = model_forward(x, y, z, w4, w5, w6)
    jax.block_until_ready((xo, yo, zo))

    # correctness check against pure-JAX reference
    xr = _ref_prelu(x * 2.0 - 1.0, w4)
    yr = _ref_prelu(y * 2.0 - 1.0, w5)
    zr = _ref_prelu(z * 2.0 - 1.0, w6)
    assert xo.shape == x.shape and yo.shape == y.shape and zo.shape == z.shape
    assert jnp.allclose(xo, xr, atol=1e-6), "x mismatch"
    assert jnp.allclose(yo, yr, atol=1e-6), "y mismatch"
    assert jnp.allclose(zo, zr, atol=1e-6), "z mismatch"

    print("KERNEL_OK")
</pallas_src>

<mosaic_0001>
module attributes {stable_mosaic.version = 11 : i64} {
  func.func @_prelu_scale_kernel(%arg0: i32, %arg1: memref<8x128xf32, #tpu.memory_space<vmem>>, %arg2: memref<8x128xf32, #tpu.memory_space<vmem>>, %arg3: memref<8x128xf32, #tpu.memory_space<vmem>>) attributes {dimension_semantics = [#tpu.dimension_semantics<parallel>], iteration_bounds = array<i64: 1>, scalar_prefetch = 0 : i64, scratch_operands = 0 : i64, tpu.core_type = #tpu.core_type<tc>, window_params = [{transform_indices = @transform_0, window_bounds = array<i64: 8, 128>}, {transform_indices = @transform_1, window_bounds = array<i64: 8, 128>}, {transform_indices = @transform_2, window_bounds = array<i64: 8, 128>}]} {
    %c0 = arith.constant 0 : index
    %c0_0 = arith.constant 0 : index
    %0 = vector.load %arg1[%c0, %c0_0] : memref<8x128xf32, #tpu.memory_space<vmem>>, vector<8x128xf32>
    %cst = arith.constant 2.000000e+00 : f32
    %1 = vector.broadcast %cst : f32 to vector<8x128xf32>
    %2 = arith.mulf %0, %1 : vector<8x128xf32>
    %cst_1 = arith.constant 1.000000e+00 : f32
    %3 = vector.broadcast %cst_1 : f32 to vector<8x128xf32>
    %4 = arith.subf %2, %3 : vector<8x128xf32>
    %cst_2 = arith.constant 0.000000e+00 : f32
    %5 = vector.broadcast %cst_2 : f32 to vector<8x128xf32>
    %6 = arith.cmpf oge, %4, %5 : vector<8x128xf32>
    %c0_3 = arith.constant 0 : index
    %c0_4 = arith.constant 0 : index
    %7 = vector.load %arg2[%c0_3, %c0_4] : memref<8x128xf32, #tpu.memory_space<vmem>>, vector<8x128xf32>
    %8 = arith.mulf %7, %4 : vector<8x128xf32>
    %9 = arith.select %6, %4, %8 : vector<8x128xi1>, vector<8x128xf32>
    %c0_5 = arith.constant 0 : index
    %c0_6 = arith.constant 0 : index
    %10 = vector.load %arg3[%c0_5, %c0_6] : memref<8x128xf32, #tpu.memory_space<vmem>>, vector<8x128xf32>
    tpu.vector_store %arg3[%c0_5, %c0_6], %9 {strides = array<i32>} : memref<8x128xf32, #tpu.memory_space<vmem>>, vector<8x128xf32>,
    return
  }
  func.func @transform_0(%arg0: i32) -> (i32, i32) {
    %c0_i32 = arith.constant 0 : i32
    %c0_i32_0 = arith.constant 0 : i32
    return %arg0, %c0_i32 : i32, i32
  }
  func.func @transform_1(%arg0: i32) -> (i32, i32) {
    %c0_i32 = arith.constant 0 : i32
    %c0_i32_0 = arith.constant 0 : i32
    return %arg0, %c0_i32 : i32, i32
  }
  func.func @transform_2(%arg0: i32) -> (i32, i32) {
    %c0_i32 = arith.constant 0 : i32
    %c0_i32_0 = arith.constant 0 : i32
    return %arg0, %c0_i32 : i32, i32
  }
}

</mosaic_0001>

<llo_original>
// kernel: tpu_custom_call.1
$region0: #{tpu_custom_call.1}
  #allocation0 [shape = 'u32[]', space=smem, size = 0x4, offset = 0x4, fixed_abs, tag = 'smem constant byte address 0x4 - core index']
  #allocation1 [shape = 'u32[144,128]{1,0:T(1,128)}', space=vmem, size = 0x12000, scoped, tag = 'internal scratch']
  %s0 = inlined_call_operand.hbm [shape: f32[8,128], index: 0, kind: input, shape index: {}]
  %s1 = inlined_call_operand.hbm [shape: f32[8,128], index: 1, kind: input, shape index: {}]
  %s2 = inlined_call_operand.hbm [shape: f32[8,128], index: 2, kind: output, shape index: {}]
  %s3 = sld [smem:[#allocation0]]
  $region26: #{tpu_custom_call.1} parent=0
    _
  %s5 = ssub.s32 1, %s3
  %s6 = scalar_select 0, %s5, %s3
  $region1: #{tpu_custom_call.1} parent=0
    #allocation2 [shape = 'u8[4096]{0}', space=vmem, size = 0x1000, scoped, tag = 'input window, operand 0, single buffered']
    #allocation3 [shape = 's32[1]{0}', space=sflag, size = 0x4, scoped, tag = 'scoped memory for tpu_custom_call.1']
    #allocation4 [shape = 's32[1]{0}', space=sflag, size = 0x4, scoped, tag = 'scoped memory for tpu_custom_call.1']
    #allocation5 [shape = 'u8[4096]{0}', space=vmem, size = 0x1000, scoped, tag = 'input window, operand 1, single buffered']
    #allocation6 [shape = 's32[1]{0}', space=sflag, size = 0x4, scoped, tag = 'scoped memory for tpu_custom_call.1']
    #allocation7 [shape = 'u8[4096]{0}', space=vmem, size = 0x1000, scoped, tag = 'output window, operand 0, single buffered']
    %7 = vsyncpa [#allocation3], 0
    %8 = vsyncpa [#allocation6], 0
    %9 = vsyncpa [#allocation4], 0
    // Predicated region
    $region2: #{tpu_custom_call.1} parent=1 // pred_check
      _
    $region3: #{tpu_custom_call.1} parent=1 // pred_check_branch
      %11 = sbr.rel (0) target = $region5
    $region4: #{tpu_custom_call.1} parent=1 // pred_region
      %s13 = ssub.s32 128, 128
      %14 = vsyncadd [#allocation3], %s13
      %s16 = sshll.u32 [#allocation2], 4
      %s17 = int_to_ptr.vmem [resolvable:$true] %s16
      %19 = dma.hbm_to_vmem [thread:$0]  %s0, 128, %s17, [#allocation3]
    $region5: #{tpu_custom_call.1} parent=1 // pred_fallthru
      _
    // Predicated region
    $region6: #{tpu_custom_call.1} parent=1 // pred_check
      _
    $region7: #{tpu_custom_call.1} parent=1 // pred_check_branch
      %21 = sbr.rel (0) target = $region9
    $region8: #{tpu_custom_call.1} parent=1 // pred_region
      %s23 = ssub.s32 128, 128
      %24 = vsyncadd [#allocation6], %s23
      %s26 = sshll.u32 [#allocation5], 4
      %s27 = int_to_ptr.vmem [resolvable:$true] %s26
      %29 = dma.hbm_to_vmem [thread:$0]  %s1, 128, %s27, [#allocation6]
    $region9: #{tpu_custom_call.1} parent=1 // pred_fallthru
      _
    // Predicated region
    $region10: #{tpu_custom_call.1} parent=1 // pred_check
      _
    $region11: #{tpu_custom_call.1} parent=1 // pred_check_branch
      %31 = sbr.rel (0) target = $region13
    $region12: #{tpu_custom_call.1} parent=1 // pred_region
      %32 = dma.done [#allocation3], 128
    $region13: #{tpu_custom_call.1} parent=1 // pred_fallthru
      _
    // Predicated region
    $region14: #{tpu_custom_call.1} parent=1 // pred_check
      _
    $region15: #{tpu_custom_call.1} parent=1 // pred_check_branch
      %34 = sbr.rel (0) target = $region17
    $region16: #{tpu_custom_call.1} parent=1 // pred_region
      %35 = dma.done [#allocation6], 128
    $region17: #{tpu_custom_call.1} parent=1 // pred_fallthru
      _
    %v36 = vld [vmem:[#allocation2] sm:$0xff]
    %v37 = vmul.f32 %v36, 2.0
    %v38 = vsub.f32 %v37, 1.0
    %vm39 = vcmp.ge.f32.partialorder %v38, 0.0
    %v40 = vld [vmem:[#allocation5] sm:$0xff]
    %v41 = vmul.f32 %v40, %v38
    %v42 = vsel %vm39, %v38, %v41
    %43 = vst [vmem:[#allocation7] sm:$0xff] %v42
    // Predicated region
    $region18: #{tpu_custom_call.1} parent=1 // pred_check
      _
    $region19: #{tpu_custom_call.1} parent=1 // pred_check_branch
      %45 = sbr.rel (0) target = $region21
    $region20: #{tpu_custom_call.1} parent=1 // pred_region
      %s47 = ssub.s32 128, 128
      %48 = vsyncadd [#allocation4], %s47
      %s50 = sshll.u32 [#allocation7], 4
      %s51 = int_to_ptr.vmem [resolvable:$true] %s50
      %53 = dma.vmem_to_hbm [thread:$0]  %s51, 128, %s2, [#allocation4]
    $region21: #{tpu_custom_call.1} parent=1 // pred_fallthru
      _
    // Predicated region
    $region22: #{tpu_custom_call.1} parent=1 // pred_check
      _
    $region23: #{tpu_custom_call.1} parent=1 // pred_check_branch
      %55 = sbr.rel (0) target = $region25
    $region24: #{tpu_custom_call.1} parent=1 // pred_region
      %56 = dma.done [#allocation4], 128
    $region25: #{tpu_custom_call.1} parent=1 // pred_fallthru
      _
    %57 = vsyncpa [#allocation3], 1
    %58 = vsyncpa [#allocation6], 1
    %59 = vsyncpa [#allocation4], 1

</llo_original>
